<compile_context>
chip_gen: v7x
topology: tpu7x:2x2x1
jax: 0.10.0
libtpu: 0.0.40
codegen_flags: <defaults>
</compile_context>

<pallas_src>
import math

import jax
import jax.numpy as jnp
from jax.experimental import pallas as pl
from jax.experimental.pallas import tpu as pltpu

_LANE = 128
_SUBLANE = 16  # batch-tile granularity; multiple of 16 keeps bf16 packing aligned


def _round_up(x, m):
    return (x + m - 1) // m * m


def _vmem_limit_bytes(tile_b):
    # Per-tile footprint: x in/out double buffers + h1/h2/logits live tiles,
    # every small feature dim lane-padded to 128 internally.  ~9 lane-padded
    # f32 (tile_b, 128) slabs is a safe over-estimate.  Clamp at 48 MiB so
    # v7x (64 MiB physical VMEM per TC) keeps headroom for compiler scratch
    # and 2-deep pipelining; floor at 16 MiB for tiny tiles.
    est = 9 * tile_b * _LANE * 4 + (2 << 20)
    return int(min(48 * 2**20, max(16 * 2**20, est)))


def bnn_mlp_kernel(x_ref, w1_ref, b1_ref, w2_ref, b2_ref, w3_ref, b3_ref, out_ref):
    """One batch tile of the (already reparameterized) BNN MLP:
    x @ W1 + b1 -> ReLU -> @ W2 + b2 -> ReLU -> @ W3 + b3 -> Sigmoid.

    Weights/biases arrive via constant index_maps, so they are fetched once
    and reused for every batch tile; the steady-state body is 3 small matmuls
    plus activations, and the stored output is the narrow real d_out width.
    """
    x = x_ref[...]                                               # [T, D_in]

    h1 = jnp.dot(x, w1_ref[...], preferred_element_type=jnp.float32) + b1_ref[...]
    h1 = jnp.maximum(h1, 0.0)                                    # [T, 32] f32

    h2 = jnp.dot(h1.astype(w2_ref.dtype), w2_ref[...],
                 preferred_element_type=jnp.float32) + b2_ref[...]
    h2 = jnp.maximum(h2, 0.0)                                    # [T, 16] f32

    logits = jnp.dot(h2.astype(w3_ref.dtype), w3_ref[...],
                     preferred_element_type=jnp.float32) + b3_ref[...]  # [T, D_out]

    # sigmoid(x) == 0.5 * tanh(x / 2) + 0.5 : exactly one EUP transcendental
    # per (real) output element, no approximate reciprocal, no padded lanes.
    out_ref[...] = 0.5 * jnp.tanh(0.5 * logits) + 0.5


def sgd_bnn_forward(x, params, eps, *, tile_b=4096, compute_dtype=jnp.bfloat16):
    """x: [B, D_in] float32. params/eps: dicts of per-layer arrays.

    tile_b guidance (after the narrow-output change the kernel is grid-step
    overhead / x-read bound): v5e 4096-8192, v6e 8192-16384, v7x <= 4096.
    compute_dtype=jnp.bfloat16 (default) keeps f32 accumulation via
    preferred_element_type; all elementwise math stays f32.  Pass
    compute_dtype=jnp.float32 for bit-tighter numerics.
    """
    batch, d_in = x.shape
    d_out = params["w3_mu"].shape[1]

    # ---- Reparameterize once per forward (hoisted out of the per-tile body) ----
    def sample(mu, ls, e):
        return mu + jnp.exp(ls) * e

    w1 = sample(params["w1_mu"], params["w1_ls"], eps["w1"]).astype(compute_dtype)
    b1 = sample(params["b1_mu"], params["b1_ls"], eps["b1"])          # f32 bias
    w2 = sample(params["w2_mu"], params["w2_ls"], eps["w2"]).astype(compute_dtype)
    b2 = sample(params["b2_mu"], params["b2_ls"], eps["b2"])
    w3 = sample(params["w3_mu"], params["w3_ls"], eps["w3"]).astype(compute_dtype)
    b3 = sample(params["b3_mu"], params["b3_ls"], eps["b3"])

    # ---- Batch tiling ----
    tile_b = max(_SUBLANE, _round_up(min(tile_b, batch), _SUBLANE))
    # Guarantee >= 2 grid steps whenever the batch allows, so the "parallel"
    # axis actually shards across v7x's two TensorCores.
    if batch >= 2 * _SUBLANE:
        tile_b = min(tile_b, _round_up(batch, 2 * _SUBLANE) // 2)
    padded_batch = _round_up(batch, tile_b)
    if padded_batch != batch:
        x = jnp.pad(x, ((0, padded_batch - batch), (0, 0)))
    x = x.astype(compute_dtype)
    grid = (padded_batch // tile_b,)

    itemsize = jnp.dtype(compute_dtype).itemsize
    cost = pl.CostEstimate(
        flops=2 * padded_batch * (d_in * 32 + 32 * 16 + 16 * d_out),
        transcendentals=padded_batch * d_out,                 # one tanh / element
        bytes_accessed=(padded_batch * d_in * itemsize        # x read
                        + padded_batch * d_out * 4            # narrow f32 out write
                        + (w1.size + w2.size + w3.size) * itemsize
                        + (b1.size + b2.size + b3.size) * 4),
    )

    const2 = lambda i: (0, 0)
    out_padded = pl.pallas_call(
        bnn_mlp_kernel,
        out_shape=jax.ShapeDtypeStruct((padded_batch, d_out), jnp.float32),
        grid=grid,
        in_specs=[
            pl.BlockSpec((tile_b, d_in), lambda i: (i, 0)),   # streamed per tile
            pl.BlockSpec(w1.shape, const2),                   # resident weights
            pl.BlockSpec(b1.shape, const2),
            pl.BlockSpec(w2.shape, const2),
            pl.BlockSpec(b2.shape, const2),
            pl.BlockSpec(w3.shape, const2),
            pl.BlockSpec(b3.shape, const2),
        ],
        out_specs=pl.BlockSpec((tile_b, d_out), lambda i: (i, 0)),
        compiler_params=pltpu.CompilerParams(
            dimension_semantics=("parallel",),
            vmem_limit_bytes=_vmem_limit_bytes(tile_b),
        ),
        cost_estimate=cost,
    )(x, w1, b1, w2, b2, w3, b3)

    return out_padded[:batch]


def init_params(key, input_dim, output_dim, prior_sigma=0.1):
    """Deterministic synthetic init mirroring BayesLinear parameter shapes.

    Stored directly in [in, out] layout (transpose of PyTorch's [out, in]).
    Biases stored as [1, out].
    """
    dims = [(input_dim, 32), (32, 16), (16, output_dim)]
    params = {}
    log_sigma0 = math.log(prior_sigma)
    keys = jax.random.split(key, len(dims) * 2)
    for i, (fan_in, fan_out) in enumerate(dims, start=1):
        kw, kb = keys[2 * (i - 1)], keys[2 * (i - 1) + 1]
        bound = 1.0 / math.sqrt(fan_in)
        params[f"w{i}_mu"] = jax.random.uniform(
            kw, (fan_in, fan_out), jnp.float32, -bound, bound)
        params[f"w{i}_ls"] = jnp.full((fan_in, fan_out), log_sigma0, jnp.float32)
        params[f"b{i}_mu"] = jax.random.uniform(
            kb, (1, fan_out), jnp.float32, -bound, bound)
        params[f"b{i}_ls"] = jnp.full((1, fan_out), log_sigma0, jnp.float32)
    return params


def sample_eps(key, input_dim, output_dim):
    """One deterministic reparameterization noise sample per forward pass."""
    dims = [(input_dim, 32), (32, 16), (16, output_dim)]
    eps = {}
    keys = jax.random.split(key, len(dims) * 2)
    for i, (fan_in, fan_out) in enumerate(dims, start=1):
        eps[f"w{i}"] = jax.random.normal(keys[2 * (i - 1)], (fan_in, fan_out), jnp.float32)
        eps[f"b{i}"] = jax.random.normal(keys[2 * (i - 1) + 1], (1, fan_out), jnp.float32)
    return eps


def reference_forward(x, params, eps):
    """Pure-JAX f32 reference of the same forward pass (for sanity checking)."""
    h = x
    for i, act in [(1, "relu"), (2, "relu"), (3, "sigmoid")]:
        w = params[f"w{i}_mu"] + jnp.exp(params[f"w{i}_ls"]) * eps[f"w{i}"]
        b = params[f"b{i}_mu"] + jnp.exp(params[f"b{i}_ls"]) * eps[f"b{i}"]
        h = h @ w + b
        h = jnp.maximum(h, 0.0) if act == "relu" else jax.nn.sigmoid(h)
    return h


if __name__ == "__main__":
    input_dim, output_dim, batch = 16, 4, 64

    root = jax.random.PRNGKey(0)
    k_x, k_p, k_e = jax.random.split(root, 3)

    x = jax.random.normal(k_x, (batch, input_dim), jnp.float32)
    params = init_params(k_p, input_dim, output_dim, prior_sigma=0.1)
    eps = sample_eps(k_e, input_dim, output_dim)

    ref = reference_forward(x, params, eps)

    # f32 path with a small tile so the batch grid is actually exercised (grid=(4,)).
    out_f32 = sgd_bnn_forward(x, params, eps, tile_b=16, compute_dtype=jnp.float32)
    out_f32 = jax.block_until_ready(out_f32)
    assert out_f32.shape == (batch, output_dim)
    assert jnp.allclose(out_f32, ref, atol=1e-4, rtol=1e-4), "f32 mismatch vs reference"

    # Default (bf16-operand) path; looser tolerance covers bf16 operand rounding.
    out_bf16 = sgd_bnn_forward(x, params, eps)
    out_bf16 = jax.block_until_ready(out_bf16)
    assert out_bf16.shape == (batch, output_dim)
    assert jnp.allclose(out_bf16, ref, atol=3e-2, rtol=3e-2), "bf16 mismatch vs reference"

    # TODO(synk): training-side pieces (SGD optimizer, BCELoss, BKLLoss) are not
    # part of forward() and are intentionally not implemented.
    print("KERNEL_OK")
</pallas_src>

<mosaic_0001>
module attributes {stable_mosaic.version = 11 : i64} {
  func.func @bnn_mlp_kernel(%arg0: i32, %arg1: memref<16x16xf32, #tpu.memory_space<vmem>>, %arg2: memref<16x32xf32, #tpu.memory_space<vmem>>, %arg3: memref<1x32xf32, #tpu.memory_space<vmem>>, %arg4: memref<32x16xf32, #tpu.memory_space<vmem>>, %arg5: memref<1x16xf32, #tpu.memory_space<vmem>>, %arg6: memref<16x4xf32, #tpu.memory_space<vmem>>, %arg7: memref<1x4xf32, #tpu.memory_space<vmem>>, %arg8: memref<16x4xf32, #tpu.memory_space<vmem>>) attributes {dimension_semantics = [#tpu.dimension_semantics<parallel>], iteration_bounds = array<i64: 4>, scalar_prefetch = 0 : i64, scratch_operands = 0 : i64, tpu.core_type = #tpu.core_type<tc>, window_params = [{transform_indices = @transform_0, window_bounds = array<i64: 16, 16>}, {pipeline_mode = #tpu.pipeline_mode<synchronous>, transform_indices = @transform_1, window_bounds = array<i64: 16, 32>}, {pipeline_mode = #tpu.pipeline_mode<synchronous>, transform_indices = @transform_2, window_bounds = array<i64: 1, 32>}, {pipeline_mode = #tpu.pipeline_mode<synchronous>, transform_indices = @transform_3, window_bounds = array<i64: 32, 16>}, {pipeline_mode = #tpu.pipeline_mode<synchronous>, transform_indices = @transform_4, window_bounds = array<i64: 1, 16>}, {pipeline_mode = #tpu.pipeline_mode<synchronous>, transform_indices = @transform_5, window_bounds = array<i64: 16, 4>}, {pipeline_mode = #tpu.pipeline_mode<synchronous>, transform_indices = @transform_6, window_bounds = array<i64: 1, 4>}, {transform_indices = @transform_7, window_bounds = array<i64: 16, 4>}]} {
    %c0 = arith.constant 0 : index
    %c0_0 = arith.constant 0 : index
    %0 = vector.load %arg1[%c0, %c0_0] : memref<16x16xf32, #tpu.memory_space<vmem>>, vector<16x16xf32>
    %c0_1 = arith.constant 0 : index
    %c0_2 = arith.constant 0 : index
    %1 = vector.load %arg2[%c0_1, %c0_2] : memref<16x32xf32, #tpu.memory_space<vmem>>, vector<16x32xf32>
    %cst = arith.constant dense<0.000000e+00> : vector<16x32xf32>
    %2 = tpu.matmul %0, %1, %cst {dimension_numbers = #tpu.dot_dimension_numbers<[1], [0], [0], [1], [0, 0, 1, 1], [], []>} : vector<16x16xf32>, vector<16x32xf32>, vector<16x32xf32> -> vector<16x32xf32>
    %c0_3 = arith.constant 0 : index
    %c0_4 = arith.constant 0 : index
    %3 = vector.load %arg3[%c0_3, %c0_4] : memref<1x32xf32, #tpu.memory_space<vmem>>, vector<1x32xf32>
    %4 = vector.broadcast %3 : vector<1x32xf32> to vector<16x32xf32>
    %5 = arith.addf %2, %4 : vector<16x32xf32>
    %cst_5 = arith.constant 0.000000e+00 : f32
    %6 = vector.broadcast %cst_5 : f32 to vector<16x32xf32>
    %7 = arith.maximumf %5, %6 : vector<16x32xf32>
    %c0_6 = arith.constant 0 : index
    %c0_7 = arith.constant 0 : index
    %8 = vector.load %arg4[%c0_6, %c0_7] : memref<32x16xf32, #tpu.memory_space<vmem>>, vector<32x16xf32>
    %cst_8 = arith.constant dense<0.000000e+00> : vector<16x16xf32>
    %9 = tpu.matmul %7, %8, %cst_8 {dimension_numbers = #tpu.dot_dimension_numbers<[1], [0], [0], [1], [0, 0, 1, 1], [], []>} : vector<16x32xf32>, vector<32x16xf32>, vector<16x16xf32> -> vector<16x16xf32>
    %c0_9 = arith.constant 0 : index
    %c0_10 = arith.constant 0 : index
    %10 = vector.load %arg5[%c0_9, %c0_10] : memref<1x16xf32, #tpu.memory_space<vmem>>, vector<1x16xf32>
    %11 = vector.broadcast %10 : vector<1x16xf32> to vector<16x16xf32>
    %12 = arith.addf %9, %11 : vector<16x16xf32>
    %cst_11 = arith.constant 0.000000e+00 : f32
    %13 = vector.broadcast %cst_11 : f32 to vector<16x16xf32>
    %14 = arith.maximumf %12, %13 : vector<16x16xf32>
    %c0_12 = arith.constant 0 : index
    %c0_13 = arith.constant 0 : index
    %15 = vector.load %arg6[%c0_12, %c0_13] : memref<16x4xf32, #tpu.memory_space<vmem>>, vector<16x4xf32>
    %cst_14 = arith.constant dense<0.000000e+00> : vector<16x4xf32>
    %16 = tpu.matmul %14, %15, %cst_14 {dimension_numbers = #tpu.dot_dimension_numbers<[1], [0], [0], [1], [0, 0, 1, 1], [], []>} : vector<16x16xf32>, vector<16x4xf32>, vector<16x4xf32> -> vector<16x4xf32>
    %c0_15 = arith.constant 0 : index
    %c0_16 = arith.constant 0 : index
    %17 = vector.load %arg7[%c0_15, %c0_16] : memref<1x4xf32, #tpu.memory_space<vmem>>, vector<1x4xf32>
    %18 = vector.broadcast %17 : vector<1x4xf32> to vector<16x4xf32>
    %19 = arith.addf %16, %18 : vector<16x4xf32>
    %cst_17 = arith.constant 5.000000e-01 : f32
    %20 = vector.broadcast %cst_17 : f32 to vector<16x4xf32>
    %21 = arith.mulf %20, %19 : vector<16x4xf32>
    %22 = math.tanh %21 : vector<16x4xf32>
    %cst_18 = arith.constant 5.000000e-01 : f32
    %23 = vector.broadcast %cst_18 : f32 to vector<16x4xf32>
    %24 = arith.mulf %23, %22 : vector<16x4xf32>
    %cst_19 = arith.constant 5.000000e-01 : f32
    %25 = vector.broadcast %cst_19 : f32 to vector<16x4xf32>
    %26 = arith.addf %24, %25 : vector<16x4xf32>
    %c0_20 = arith.constant 0 : index
    %c0_21 = arith.constant 0 : index
    %27 = vector.load %arg8[%c0_20, %c0_21] : memref<16x4xf32, #tpu.memory_space<vmem>>, vector<16x4xf32>
    tpu.vector_store %arg8[%c0_20, %c0_21], %26 {strides = array<i32>} : memref<16x4xf32, #tpu.memory_space<vmem>>, vector<16x4xf32>,
    return
  }
  func.func @transform_0(%arg0: i32) -> (i32, i32) {
    %c0_i32 = arith.constant 0 : i32
    %c0_i32_0 = arith.constant 0 : i32
    return %arg0, %c0_i32 : i32, i32
  }
  func.func @transform_1(%arg0: i32) -> (i32, i32) {
    %c0_i32 = arith.constant 0 : i32
    %c0_i32_0 = arith.constant 0 : i32
    %c0_i32_1 = arith.constant 0 : i32
    return %c0_i32, %c0_i32_0 : i32, i32
  }
  func.func @transform_2(%arg0: i32) -> (i32, i32) {
    %c0_i32 = arith.constant 0 : i32
    %c0_i32_0 = arith.constant 0 : i32
    %c0_i32_1 = arith.constant 0 : i32
    return %c0_i32, %c0_i32_0 : i32, i32
  }
  func.func @transform_3(%arg0: i32) -> (i32, i32) {
    %c0_i32 = arith.constant 0 : i32
    %c0_i32_0 = arith.constant 0 : i32
    %c0_i32_1 = arith.constant 0 : i32
    return %c0_i32, %c0_i32_0 : i32, i32
  }
  func.func @transform_4(%arg0: i32) -> (i32, i32) {
    %c0_i32 = arith.constant 0 : i32
    %c0_i32_0 = arith.constant 0 : i32
    %c0_i32_1 = arith.constant 0 : i32
    return %c0_i32, %c0_i32_0 : i32, i32
  }
  func.func @transform_5(%arg0: i32) -> (i32, i32) {
    %c0_i32 = arith.constant 0 : i32
    %c0_i32_0 = arith.constant 0 : i32
    %c0_i32_1 = arith.constant 0 : i32
    return %c0_i32, %c0_i32_0 : i32, i32
  }
  func.func @transform_6(%arg0: i32) -> (i32, i32) {
    %c0_i32 = arith.constant 0 : i32
    %c0_i32_0 = arith.constant 0 : i32
    %c0_i32_1 = arith.constant 0 : i32
    return %c0_i32, %c0_i32_0 : i32, i32
  }
  func.func @transform_7(%arg0: i32) -> (i32, i32) {
    %c0_i32 = arith.constant 0 : i32
    %c0_i32_0 = arith.constant 0 : i32
    return %arg0, %c0_i32 : i32, i32
  }
}

</mosaic_0001>

<llo_original>
// kernel: tpu_custom_call.1
$region0: #{tpu_custom_call.1}
  #allocation0 [shape = 'u32[]', space=smem, size = 0x4, offset = 0x4, fixed_abs, tag = 'smem constant byte address 0x4 - core index']
  #allocation1 [shape = 'u32[144,128]{1,0:T(1,128)}', space=vmem, size = 0x12000, scoped, tag = 'internal scratch']
  %s0 = inlined_call_operand.vmem [shape: f32[64,16], index: 0, kind: input, shape index: {}]
  %s1 = inlined_call_operand.vmem [shape: f32[16,32], index: 1, kind: input, shape index: {}]
  %s2 = inlined_call_operand.vmem [shape: f32[1,32], index: 2, kind: input, shape index: {}]
  %s3 = inlined_call_operand.vmem [shape: f32[32,16], index: 3, kind: input, shape index: {}]
  %s4 = inlined_call_operand.vmem [shape: f32[1,16], index: 4, kind: input, shape index: {}]
  %s5 = inlined_call_operand.vmem [shape: f32[16,4], index: 5, kind: input, shape index: {}]
  %s6 = inlined_call_operand.vmem [shape: f32[1,4], index: 6, kind: input, shape index: {}]
  %s7 = inlined_call_operand.vmem [shape: f32[64,4], index: 7, kind: output, shape index: {}]
  %s8 = sld [smem:[#allocation0]]
  $region61: #{tpu_custom_call.1} parent=0
    _
  %s10 = ssub.s32 1, %s8
  %s11 = scalar_select 0, %s10, %s8
  loop: start=0, step=1, limit=6
  $region2: #{tpu_custom_call.1} parent=0 // loop_pre_header
    _
  $region3: #{tpu_custom_call.1} parent=0 // loop_header
    %s13 = sphi 0, %s17
    %p14 = scmp.ge.s32.totalorder %s13, 6
    %s23 = sphi 0, %s25
    %s26 = sphi 0, %s23
    %s27 = sphi 0, %s26
    %s43 = sphi 0, %s27
    %s47 = sphi 0, %s47
    %s49 = sphi 0, %s47
    %s50 = sphi 0, %s49
    %s64 = sphi 0, %s50
    %s68 = sphi 0, %s68
    %s70 = sphi 0, %s68
    %s71 = sphi 0, %s70
    %s85 = sphi 0, %s71
    %s89 = sphi 0, %s89
    %s91 = sphi 0, %s89
    %s92 = sphi 0, %s91
    %s106 = sphi 0, %s92
    %s110 = sphi 0, %s110
    %s112 = sphi 0, %s110
    %s113 = sphi 0, %s112
    %s127 = sphi 0, %s113
    %s131 = sphi 0, %s131
    %s133 = sphi 0, %s131
    %s134 = sphi 0, %s133
    %s148 = sphi 0, %s134
    %s152 = sphi 0, %s152
    %s154 = sphi 0, %s152
    %s155 = sphi 0, %s154
    %s169 = sphi 0, %s155
    %s175 = sphi 0, %s177
    %s178 = sphi 0, %s175
    %s179 = sphi 0, %s178
    %s195 = sphi 0, %s179
  $region4: #{tpu_custom_call.1} parent=0 // loop_header_branch
    %16 = sbr.rel (%p14) target = $region8
  $region5: #{tpu_custom_call.1} parent=0 // loop_body
    %s18 = ssub.s32 %s13, 1
    %s19 = ssub.s32 %s13, 2
    %s20 = sadd.s32 %s13, 1
    %s21 = ssub.s32 %s13, %s20
    %p22 = scmp.eq.s32.totalorder %s21, 0
    %s24 = sadd.s32 %s23, 1
    %s25 = scalar_select %p22, %s23, %s24
    %p28 = pneg %p22
    %p29 = scmp.eq.s32.totalorder %s13, 3
    %p30 = por %p28, %p29
    %p31 = scmp.ne.s32.totalorder %s23, %s26
    %p32 = scmp.eq.s32.totalorder %s13, 0
    %p33 = por %p31, %p32
    %p34 = scmp.ne.s32.totalorder %s23, %s26
    %p35 = scmp.eq.s32.totalorder %s18, 3
    %p36 = por %p34, %p35
    %p37 = scmp.ne.s32.totalorder %s26, %s27
    %p38 = scmp.eq.s32.totalorder %s18, 0
    %p39 = por %p37, %p38
    %p40 = scmp.ne.s32.totalorder %s26, %s27
    %p41 = scmp.eq.s32.totalorder %s19, 3
    %p42 = por %p40, %p41
    %p44 = scmp.ne.s32.totalorder %s27, %s43
    %p45 = scmp.eq.s32.totalorder %s19, 0
    %p46 = por %p44, %p45
    %s48 = sadd.s32 %s47, 1
    %p51 = scmp.eq.s32.totalorder %s13, 3
    %p52 = scmp.ne.s32.totalorder %s47, %s49
    %p53 = scmp.eq.s32.totalorder %s13, 0
    %p54 = por %p52, %p53
    %p55 = scmp.ne.s32.totalorder %s47, %s49
    %p56 = scmp.eq.s32.totalorder %s18, 3
    %p57 = por %p55, %p56
    %p58 = scmp.ne.s32.totalorder %s49, %s50
    %p59 = scmp.eq.s32.totalorder %s18, 0
    %p60 = por %p58, %p59
    %p61 = scmp.ne.s32.totalorder %s49, %s50
    %p62 = scmp.eq.s32.totalorder %s19, 3
    %p63 = por %p61, %p62
    %p65 = scmp.ne.s32.totalorder %s50, %s64
    %p66 = scmp.eq.s32.totalorder %s19, 0
    %p67 = por %p65, %p66
    %s69 = sadd.s32 %s68, 1
    %p72 = scmp.eq.s32.totalorder %s13, 3
    %p73 = scmp.ne.s32.totalorder %s68, %s70
    %p74 = scmp.eq.s32.totalorder %s13, 0
    %p75 = por %p73, %p74
    %p76 = scmp.ne.s32.totalorder %s68, %s70
    %p77 = scmp.eq.s32.totalorder %s18, 3
    %p78 = por %p76, %p77
    %p79 = scmp.ne.s32.totalorder %s70, %s71
    %p80 = scmp.eq.s32.totalorder %s18, 0
    %p81 = por %p79, %p80
    %p82 = scmp.ne.s32.totalorder %s70, %s71
    %p83 = scmp.eq.s32.totalorder %s19, 3
    %p84 = por %p82, %p83
    %p86 = scmp.ne.s32.totalorder %s71, %s85
    %p87 = scmp.eq.s32.totalorder %s19, 0
    %p88 = por %p86, %p87
    %s90 = sadd.s32 %s89, 1
    %p93 = scmp.eq.s32.totalorder %s13, 3
    %p94 = scmp.ne.s32.totalorder %s89, %s91
    %p95 = scmp.eq.s32.totalorder %s13, 0
    %p96 = por %p94, %p95
    %p97 = scmp.ne.s32.totalorder %s89, %s91
    %p98 = scmp.eq.s32.totalorder %s18, 3
    %p99 = por %p97, %p98
    %p100 = scmp.ne.s32.totalorder %s91, %s92
    %p101 = scmp.eq.s32.totalorder %s18, 0
    %p102 = por %p100, %p101
    %p103 = scmp.ne.s32.totalorder %s91, %s92
    %p104 = scmp.eq.s32.totalorder %s19, 3
    %p105 = por %p103, %p104
    %p107 = scmp.ne.s32.totalorder %s92, %s106
    %p108 = scmp.eq.s32.totalorder %s19, 0
    %p109 = por %p107, %p108
    %s111 = sadd.s32 %s110, 1
    %p114 = scmp.eq.s32.totalorder %s13, 3
    %p115 = scmp.ne.s32.totalorder %s110, %s112
    %p116 = scmp.eq.s32.totalorder %s13, 0
    %p117 = por %p115, %p116
    %p118 = scmp.ne.s32.totalorder %s110, %s112
    %p119 = scmp.eq.s32.totalorder %s18, 3
    %p120 = por %p118, %p119
    %p121 = scmp.ne.s32.totalorder %s112, %s113
    %p122 = scmp.eq.s32.totalorder %s18, 0
    %p123 = por %p121, %p122
    %p124 = scmp.ne.s32.totalorder %s112, %s113
    %p125 = scmp.eq.s32.totalorder %s19, 3
    %p126 = por %p124, %p125
    %p128 = scmp.ne.s32.totalorder %s113, %s127
    %p129 = scmp.eq.s32.totalorder %s19, 0
    %p130 = por %p128, %p129
    %s132 = sadd.s32 %s131, 1
    %p135 = scmp.eq.s32.totalorder %s13, 3
    %p136 = scmp.ne.s32.totalorder %s131, %s133
    %p137 = scmp.eq.s32.totalorder %s13, 0
    %p138 = por %p136, %p137
    %p139 = scmp.ne.s32.totalorder %s131, %s133
    %p140 = scmp.eq.s32.totalorder %s18, 3
    %p141 = por %p139, %p140
    %p142 = scmp.ne.s32.totalorder %s133, %s134
    %p143 = scmp.eq.s32.totalorder %s18, 0
    %p144 = por %p142, %p143
    %p145 = scmp.ne.s32.totalorder %s133, %s134
    %p146 = scmp.eq.s32.totalorder %s19, 3
    %p147 = por %p145, %p146
    %p149 = scmp.ne.s32.totalorder %s134, %s148
    %p150 = scmp.eq.s32.totalorder %s19, 0
    %p151 = por %p149, %p150
    %s153 = sadd.s32 %s152, 1
    %p156 = scmp.eq.s32.totalorder %s13, 3
    %p157 = scmp.ne.s32.totalorder %s152, %s154
    %p158 = scmp.eq.s32.totalorder %s13, 0
    %p159 = por %p157, %p158
    %p160 = scmp.ne.s32.totalorder %s152, %s154
    %p161 = scmp.eq.s32.totalorder %s18, 3
    %p162 = por %p160, %p161
    %p163 = scmp.ne.s32.totalorder %s154, %s155
    %p164 = scmp.eq.s32.totalorder %s18, 0
    %p165 = por %p163, %p164
    %p166 = scmp.ne.s32.totalorder %s154, %s155
    %p167 = scmp.eq.s32.totalorder %s19, 3
    %p168 = por %p166, %p167
    %p170 = scmp.ne.s32.totalorder %s155, %s169
    %p171 = scmp.eq.s32.totalorder %s19, 0
    %p172 = por %p170, %p171
    %s173 = ssub.s32 %s13, %s20
    %p174 = scmp.eq.s32.totalorder %s173, 0
    %s176 = sadd.s32 %s175, 1
    %s177 = scalar_select %p174, %s175, %s176
    %p180 = pneg %p174
    %p181 = scmp.eq.s32.totalorder %s13, 3
    %p182 = por %p180, %p181
    %p183 = scmp.ne.s32.totalorder %s175, %s178
    %p184 = scmp.eq.s32.totalorder %s13, 0
    %p185 = por %p183, %p184
    %p186 = scmp.ne.s32.totalorder %s175, %s178
    %p187 = scmp.eq.s32.totalorder %s18, 3
    %p188 = por %p186, %p187
    %p189 = scmp.ne.s32.totalorder %s178, %s179
    %p190 = scmp.eq.s32.totalorder %s18, 0
    %p191 = por %p189, %p190
    %p192 = scmp.ne.s32.totalorder %s178, %s179
    %p193 = scmp.eq.s32.totalorder %s19, 3
    %p194 = por %p192, %p193
    %p196 = scmp.ne.s32.totalorder %s179, %s195
    %p197 = scmp.eq.s32.totalorder %s19, 0
    %p198 = por %p196, %p197
    %p199 = scmp.le.s32.totalorder 1, %s13
    %p200 = scmp.lt.s32.totalorder %s13, 5
    %p201 = pnand %p199, %p200
    %p202 = pneg %p201
    // Predicated region
    $region9: #{tpu_custom_call.1} parent=5 // pred_check
      _
    $region10: #{tpu_custom_call.1} parent=5 // pred_check_branch
      %204 = sbr.rel (%p201) target = $region12
    $region11: #{tpu_custom_call.1} parent=5 // pred_region
      %s205 = ssub.s32 %s13, 1
      // Predicated region
      $region13: #{tpu_custom_call.1} parent=11 // pred_check
        %p206 = pneg %p60
      $region14: #{tpu_custom_call.1} parent=11 // pred_check_branch
        %208 = sbr.rel (%p206) target = $region16
      $region15: #{tpu_custom_call.1} parent=11 // pred_region
        _
      $region16: #{tpu_custom_call.1} parent=11 // pred_fallthru
        _
      // Predicated region
      $region17: #{tpu_custom_call.1} parent=11 // pred_check
        %p209 = pneg %p81
      $region18: #{tpu_custom_call.1} parent=11 // pred_check_branch
        %211 = sbr.rel (%p209) target = $region20
      $region19: #{tpu_custom_call.1} parent=11 // pred_region
        _
      $region20: #{tpu_custom_call.1} parent=11 // pred_fallthru
        _
      // Predicated region
      $region21: #{tpu_custom_call.1} parent=11 // pred_check
        %p212 = pneg %p102
      $region22: #{tpu_custom_call.1} parent=11 // pred_check_branch
        %214 = sbr.rel (%p212) target = $region24
      $region23: #{tpu_custom_call.1} parent=11 // pred_region
        _
      $region24: #{tpu_custom_call.1} parent=11 // pred_fallthru
        _
      // Predicated region
      $region25: #{tpu_custom_call.1} parent=11 // pred_check
        %p215 = pneg %p123
      $region26: #{tpu_custom_call.1} parent=11 // pred_check_branch
        %217 = sbr.rel (%p215) target = $region28
      $region27: #{tpu_custom_call.1} parent=11 // pred_region
        _
      $region28: #{tpu_custom_call.1} parent=11 // pred_fallthru
        _
      // Predicated region
      $region29: #{tpu_custom_call.1} parent=11 // pred_check
        %p218 = pneg %p144
      $region30: #{tpu_custom_call.1} parent=11 // pred_check_branch
        %220 = sbr.rel (%p218) target = $region32
      $region31: #{tpu_custom_call.1} parent=11 // pred_region
        _
      $region32: #{tpu_custom_call.1} parent=11 // pred_fallthru
        _
      // Predicated region
      $region33: #{tpu_custom_call.1} parent=11 // pred_check
        %p221 = pneg %p165
      $region34: #{tpu_custom_call.1} parent=11 // pred_check_branch
        %223 = sbr.rel (%p221) target = $region36
      $region35: #{tpu_custom_call.1} parent=11 // pred_region
        _
      $region36: #{tpu_custom_call.1} parent=11 // pred_fallthru
        _
    $region12: #{tpu_custom_call.1} parent=5 // pred_fallthru
      _
    %p224 = scmp.lt.s32.totalorder %s13, 4
    // Predicated region
    $region37: #{tpu_custom_call.1} parent=5 // pred_check
      %p225 = pneg %p224
    $region38: #{tpu_custom_call.1} parent=5 // pred_check_branch
      %227 = sbr.rel (%p225) target = $region40
    $region39: #{tpu_custom_call.1} parent=5 // pred_region
      // Predicated region
      $region41: #{tpu_custom_call.1} parent=39 // pred_check
        %p228 = pneg %p33
      $region42: #{tpu_custom_call.1} parent=39 // pred_check_branch
        %230 = sbr.rel (%p228) target = $region44
      $region43: #{tpu_custom_call.1} parent=39 // pred_region
        %s231 = smul.u32 2, %s13
        %p232 = scmp.lt.s32.totalorder %s231, 7
        %s233 = scalar_select %p232, %s231, 7
        %s234 = smul.addr %s233, 8
        %s235 = scalar_lea.vmem %s0, %s234
        %s236 = smul.u32 2, %s13
      $region44: #{tpu_custom_call.1} parent=39 // pred_fallthru
        _
    $region40: #{tpu_custom_call.1} parent=5 // pred_fallthru
      _
    %p237 = scmp.le.s32.totalorder 1, %s13
    %p238 = scmp.lt.s32.totalorder %s13, 5
    %p239 = pnand %p237, %p238
    %p240 = pneg %p239
    // Predicated region
    $region45: #{tpu_custom_call.1} parent=5 // pred_check
      _
    $region46: #{tpu_custom_call.1} parent=5 // pred_check_branch
      %242 = sbr.rel (%p239) target = $region48
    $region47: #{tpu_custom_call.1} parent=5 // pred_region
      %s243 = ssub.s32 %s13, 1
      %s244 = smul.u32 2, %s18
      %p245 = scmp.lt.s32.totalorder %s244, 7
      %s246 = scalar_select %p245, %s244, 7
      %s247 = smul.addr %s246, 8
      %s248 = scalar_lea.vmem %s0, %s247
      %p249 = pneg %p39
      %p250 = pneg %p36
      %p251 = pneg %p60
      %p252 = pneg %p57
      %p253 = pneg %p81
      %p254 = pneg %p78
      %p255 = pneg %p102
      %p256 = pneg %p99
      %p257 = pneg %p123
      %p258 = pneg %p120
      %p259 = pneg %p144
      %p260 = pneg %p141
      %p261 = pneg %p165
      %p262 = pneg %p162
      %p263 = pneg %p191
      %p264 = pneg %p188
      %s265 = smul.u32 2, %s18
      %p266 = scmp.lt.s32.totalorder %s265, 7
      %s267 = scalar_select %p266, %s265, 7
      %s268 = smul.addr %s267, 8
      %s269 = scalar_lea.vmem %s7, %s268
      %s270 = smul.u32 2, %s18
      %p271 = scmp.lt.s32.totalorder %s270, 7
      %s272 = scalar_select %p271, %s270, 7
      %s273 = smul.addr %s272, 8
      %s274 = scalar_lea.vmem %s0, %s273
      %s275 = smul.u32 2, %s18
      %s276 = smul.u32 2, %s18
      %p277 = scmp.lt.s32.totalorder %s276, 7
      %s278 = scalar_select %p277, %s276, 7
      %s279 = smul.addr %s278, 8
      %s280 = scalar_lea.vmem %s7, %s279
      %s281 = smul.u32 2, %s18
      %v282 = vld [vmem:[%s274] sm:$0xff]
      %v283 = vld [vmem:[%s274 + $0x8] sm:$0xff]
      %v284 = vld [vmem:[%s1] sm:$0xff]
      %v285 = vld [vmem:[%s1 + $0x8] sm:$0xff]
      %v286 = vld [vmem:[%s2] sm:$0x1]
      %v288 = vlaneseq
      %v289 = vshrl.u32 %v288, 7
      %v290 = vsub.s32 0, %v289
      %v291 = vrot.slane %v286, %v290
      %vm293 = vcmask 130048
      %v295 = vsel %vm293, %v282, 0
      %v298 = vsel %vm293, %v283, 0
      %300 = vmatprep.subr.mxu0 0.0
      %301 = vmatpush1.msra.mxu0 %v284
      %302 = vmatprep.subr.mxu0 0.0
      %303 = vmatpush1.msra.mxu0 %v285
      %304 = vmatprep.subr.mxu0 0.0
      %305 = vmatpush1.msra.mxu0 0.0
      %306 = vmatprep.subr.mxu0 0.0
      %307 = vmatpush1.msra.mxu0 0.0
      %308 = vmatprep.subr.mxu0 0.0
      %309 = vmatpush1.msra.mxu0 0.0
      %310 = vmatprep.subr.mxu0 0.0
      %311 = vmatpush1.msra.mxu0 0.0
      %312 = vmatprep.subr.mxu0 0.0
      %313 = vmatpush1.msra.mxu0 0.0
      %314 = vmatprep.subr.mxu0 0.0
      %315 = vmatpush1.msra.mxu0 0.0
      %316 = vmatprep.subr.mxu0 0.0
      %317 = vmatpush1.msra.mxu0 0.0
      %318 = vmatprep.subr.mxu0 0.0
      %319 = vmatpush1.msra.mxu0 0.0
      %320 = vmatprep.subr.mxu0 0.0
      %321 = vmatpush1.msra.mxu0 0.0
      %322 = vmatprep.subr.mxu0 0.0
      %323 = vmatpush1.msra.mxu0 0.0
      %324 = vmatprep.subr.mxu0 0.0
      %325 = vmatpush1.msra.mxu0 0.0
      %326 = vmatprep.subr.mxu0 0.0
      %327 = vmatpush1.msra.mxu0 0.0
      %328 = vmatprep.subr.mxu0 0.0
      %329 = vmatpush1.msra.mxu0 0.0
      %330 = vmatprep.subr.mxu0 0.0
      %331 = vmatpush1.msra.mxu0 0.0
      %332 = vmatprep.subr.mxu0 0.0
      %333 = vmatpush1.msra.mxu0 0.0
      %334 = vmatprep.subr.mxu0 0.0
      %335 = vmatpush1.msra.mxu0 0.0
      %336 = vmatprep.subr.mxu0 0.0
      %337 = vmatpush1.msra.mxu0 0.0
      %338 = vmatprep.subr.mxu0 0.0
      %339 = vmatpush1.msra.mxu0 0.0
      %340 = vmatprep.subr.mxu0 0.0
      %341 = vmatpush1.msra.mxu0 0.0
      %342 = vmatprep.subr.mxu0 0.0
      %343 = vmatpush1.msra.mxu0 0.0
      %344 = vmatprep.subr.mxu0 0.0
      %345 = vmatpush1.msra.mxu0 0.0
      %346 = vmatprep.subr.mxu0 0.0
      %347 = vmatpush1.msra.mxu0 0.0
      %348 = vmatprep.subr.mxu0 0.0
      %349 = vmatpush1.msra.mxu0 0.0
      %350 = vmatprep.subr.mxu0 0.0
      %351 = vmatpush1.msra.mxu0 0.0
      %352 = vmatprep.subr.mxu0 0.0
      %353 = vmatpush1.msra.mxu0 0.0
      %354 = vmatprep.subr.mxu0 0.0
      %355 = vmatpush1.msra.mxu0 0.0
      %356 = vmatprep.subr.mxu0 0.0
      %357 = vmatpush1.msra.mxu0 0.0
      %358 = vmatprep.subr.mxu0 0.0
      %359 = vmatpush1.msra.mxu0 0.0
      %360 = vmatprep.subr.mxu0 0.0
      %361 = vmatpush1.msra.mxu0 0.0
      %362 = vmatprep.subr.mxu0 0.0
      %363 = vmatpush1.msra.mxu0 0.0
      %364 = vmatprep.mubr.f32.mxu0 0.0
      %365 = vmatmul.mubr.f32.gmra.mrb[0].mxu0 %v295
      %v366 = vpop.f32.mrb[0].mxu0
      %v367 = vadd.f32 %v291, %v366
      %v368 = vpop.f32.mrb[0].mxu0
      %369 = vmatprep.mubr.f32.mxu0 0.0
      %370 = vmatmul.mubr.f32.gmra.mrb[0].mxu0 %v298
      %v371 = vpop.f32.mrb[0].mxu0
      %v372 = vadd.f32 %v291, %v371
      %v373 = vpop.f32.mrb[0].mxu0
      %374 = vdwg.mxu0
      %v375 = vmax.f32 %v367, 0.0
      %v376 = vmax.f32 %v372, 0.0
      %v377 = vld [vmem:[%s3] sm:$0xff]
      %v378 = vld [vmem:[%s3 + $0x8] sm:$0xff]
      %v379 = vld [vmem:[%s3 + $0x10] sm:$0xff]
      %v380 = vld [vmem:[%s3 + $0x18] sm:$0xff]
      %v381 = vld [vmem:[%s4] sm:$0x1]
      %v383 = vlaneseq
      %v384 = vshrl.u32 %v383, 7
      %v385 = vsub.s32 0, %v384
      %v386 = vrot.slane %v381, %v385
      %vm388 = vcmask 261120
      %v390 = vsel %vm388, %v375, 0
      %v393 = vsel %vm388, %v376, 0
      %395 = vmatprep.subr.mxu0 0.0
      %396 = vmatpush1.msra.mxu0 %v377
      %397 = vmatprep.subr.mxu0 0.0
      %398 = vmatpush1.msra.mxu0 %v378
      %399 = vmatprep.subr.mxu0 0.0
      %400 = vmatpush1.msra.mxu0 %v379
      %401 = vmatprep.subr.mxu0 0.0
      %402 = vmatpush1.msra.mxu0 %v380
      %403 = vmatprep.subr.mxu0 0.0
      %404 = vmatpush1.msra.mxu0 0.0
      %405 = vmatprep.subr.mxu0 0.0
      %406 = vmatpush1.msra.mxu0 0.0
      %407 = vmatprep.subr.mxu0 0.0
      %408 = vmatpush1.msra.mxu0 0.0
      %409 = vmatprep.subr.mxu0 0.0
      %410 = vmatpush1.msra.mxu0 0.0
      %411 = vmatprep.subr.mxu0 0.0
      %412 = vmatpush1.msra.mxu0 0.0
      %413 = vmatprep.subr.mxu0 0.0
      %414 = vmatpush1.msra.mxu0 0.0
      %415 = vmatprep.subr.mxu0 0.0
      %416 = vmatpush1.msra.mxu0 0.0
      %417 = vmatprep.subr.mxu0 0.0
      %418 = vmatpush1.msra.mxu0 0.0
      %419 = vmatprep.subr.mxu0 0.0
      %420 = vmatpush1.msra.mxu0 0.0
      %421 = vmatprep.subr.mxu0 0.0
      %422 = vmatpush1.msra.mxu0 0.0
      %423 = vmatprep.subr.mxu0 0.0
      %424 = vmatpush1.msra.mxu0 0.0
      %425 = vmatprep.subr.mxu0 0.0
      %426 = vmatpush1.msra.mxu0 0.0
      %427 = vmatprep.subr.mxu0 0.0
      %428 = vmatpush1.msra.mxu0 0.0
      %429 = vmatprep.subr.mxu0 0.0
      %430 = vmatpush1.msra.mxu0 0.0
      %431 = vmatprep.subr.mxu0 0.0
      %432 = vmatpush1.msra.mxu0 0.0
      %433 = vmatprep.subr.mxu0 0.0
      %434 = vmatpush1.msra.mxu0 0.0
      %435 = vmatprep.subr.mxu0 0.0
      %436 = vmatpush1.msra.mxu0 0.0
      %437 = vmatprep.subr.mxu0 0.0
      %438 = vmatpush1.msra.mxu0 0.0
      %439 = vmatprep.subr.mxu0 0.0
      %440 = vmatpush1.msra.mxu0 0.0
      %441 = vmatprep.subr.mxu0 0.0
      %442 = vmatpush1.msra.mxu0 0.0
      %443 = vmatprep.subr.mxu0 0.0
      %444 = vmatpush1.msra.mxu0 0.0
      %445 = vmatprep.subr.mxu0 0.0
      %446 = vmatpush1.msra.mxu0 0.0
      %447 = vmatprep.subr.mxu0 0.0
      %448 = vmatpush1.msra.mxu0 0.0
      %449 = vmatprep.subr.mxu0 0.0
      %450 = vmatpush1.msra.mxu0 0.0
      %451 = vmatprep.subr.mxu0 0.0
      %452 = vmatpush1.msra.mxu0 0.0
      %453 = vmatprep.subr.mxu0 0.0
      %454 = vmatpush1.msra.mxu0 0.0
      %455 = vmatprep.subr.mxu0 0.0
      %456 = vmatpush1.msra.mxu0 0.0
      %457 = vmatprep.subr.mxu0 0.0
      %458 = vmatpush1.msra.mxu0 0.0
      %459 = vmatprep.mubr.f32.mxu0 0.0
      %460 = vmatmul.mubr.f32.gmra.mrb[0].mxu0 %v390
      %v461 = vpop.f32.mrb[0].mxu0
      %v462 = vadd.f32 %v386, %v461
      %v463 = vpop.f32.mrb[0].mxu0
      %464 = vmatprep.mubr.f32.mxu0 0.0
      %465 = vmatmul.mubr.f32.gmra.mrb[0].mxu0 %v393
      %v466 = vpop.f32.mrb[0].mxu0
      %v467 = vadd.f32 %v386, %v466
      %v468 = vpop.f32.mrb[0].mxu0
      %469 = vdwg.mxu0
      %v470 = vmax.f32 %v462, 0.0
      %v471 = vmax.f32 %v467, 0.0
      %v472 = vld [vmem:[%s5] sm:$0xff]
      %v473 = vld [vmem:[%s5 + $0x8] sm:$0xff]
      %v474 = vld [vmem:[%s6] sm:$0x1]
      %v476 = vlaneseq
      %v477 = vshrl.u32 %v476, 7
      %v478 = vsub.s32 0, %v477
      %v479 = vrot.slane %v474, %v478
      %v482 = vsel %vm293, %v470, 0
      %v485 = vsel %vm293, %v471, 0
      %487 = vmatprep.subr.mxu0 0.0
      %488 = vmatpush1.msra.mxu0 %v472
      %489 = vmatprep.subr.mxu0 0.0
      %490 = vmatpush1.msra.mxu0 %v473
      %491 = vmatprep.subr.mxu0 0.0
      %492 = vmatpush1.msra.mxu0 0.0
      %493 = vmatprep.subr.mxu0 0.0
      %494 = vmatpush1.msra.mxu0 0.0
      %495 = vmatprep.subr.mxu0 0.0
      %496 = vmatpush1.msra.mxu0 0.0
      %497 = vmatprep.subr.mxu0 0.0
      %498 = vmatpush1.msra.mxu0 0.0
      %499 = vmatprep.subr.mxu0 0.0
      %500 = vmatpush1.msra.mxu0 0.0
      %501 = vmatprep.subr.mxu0 0.0
      %502 = vmatpush1.msra.mxu0 0.0
      %503 = vmatprep.subr.mxu0 0.0
      %504 = vmatpush1.msra.mxu0 0.0
      %505 = vmatprep.subr.mxu0 0.0
      %506 = vmatpush1.msra.mxu0 0.0
      %507 = vmatprep.subr.mxu0 0.0
      %508 = vmatpush1.msra.mxu0 0.0
      %509 = vmatprep.subr.mxu0 0.0
      %510 = vmatpush1.msra.mxu0 0.0
      %511 = vmatprep.subr.mxu0 0.0
      %512 = vmatpush1.msra.mxu0 0.0
      %513 = vmatprep.subr.mxu0 0.0
      %514 = vmatpush1.msra.mxu0 0.0
      %515 = vmatprep.subr.mxu0 0.0
      %516 = vmatpush1.msra.mxu0 0.0
      %517 = vmatprep.subr.mxu0 0.0
      %518 = vmatpush1.msra.mxu0 0.0
      %519 = vmatprep.subr.mxu0 0.0
      %520 = vmatpush1.msra.mxu0 0.0
      %521 = vmatprep.subr.mxu0 0.0
      %522 = vmatpush1.msra.mxu0 0.0
      %523 = vmatprep.subr.mxu0 0.0
      %524 = vmatpush1.msra.mxu0 0.0
      %525 = vmatprep.subr.mxu0 0.0
      %526 = vmatpush1.msra.mxu0 0.0
      %527 = vmatprep.subr.mxu0 0.0
      %528 = vmatpush1.msra.mxu0 0.0
      %529 = vmatprep.subr.mxu0 0.0
      %530 = vmatpush1.msra.mxu0 0.0
      %531 = vmatprep.subr.mxu0 0.0
      %532 = vmatpush1.msra.mxu0 0.0
      %533 = vmatprep.subr.mxu0 0.0
      %534 = vmatpush1.msra.mxu0 0.0
      %535 = vmatprep.subr.mxu0 0.0
      %536 = vmatpush1.msra.mxu0 0.0
      %537 = vmatprep.subr.mxu0 0.0
      %538 = vmatpush1.msra.mxu0 0.0
      %539 = vmatprep.subr.mxu0 0.0
      %540 = vmatpush1.msra.mxu0 0.0
      %541 = vmatprep.subr.mxu0 0.0
      %542 = vmatpush1.msra.mxu0 0.0
      %543 = vmatprep.subr.mxu0 0.0
      %544 = vmatpush1.msra.mxu0 0.0
      %545 = vmatprep.subr.mxu0 0.0
      %546 = vmatpush1.msra.mxu0 0.0
      %547 = vmatprep.subr.mxu0 0.0
      %548 = vmatpush1.msra.mxu0 0.0
      %549 = vmatprep.subr.mxu0 0.0
      %550 = vmatpush1.msra.mxu0 0.0
      %551 = vmatprep.mubr.f32.mxu0 0.0
      %552 = vmatmul.mubr.f32.gmra.mrb[0].mxu0 %v482
      %v553 = vpop.f32.mrb[0].mxu0
      %v554 = vadd.f32 %v479, %v553
      %v555 = vpop.f32.mrb[0].mxu0
      %556 = vmatprep.mubr.f32.mxu0 0.0
      %557 = vmatmul.mubr.f32.gmra.mrb[0].mxu0 %v485
      %v558 = vpop.f32.mrb[0].mxu0
      %v559 = vadd.f32 %v479, %v558
      %v560 = vpop.f32.mrb[0].mxu0
      %561 = vdwg.mxu0
      %v562 = vmul.f32 %v554, 0.5
      %v563 = vmul.f32 %v559, 0.5
      %v564 = vtanh.pop %v562
      %v565 = vtanh.pop %v563
      %v566 = vmul.f32 %v564, 0.5
      %v567 = vmul.f32 %v565, 0.5
      %v568 = vadd.f32 %v566, 0.5
      %v569 = vadd.f32 %v567, 0.5
      %vm570 = vcmask 31744
      %571 = vst.msk [vmem:[%s280] sm:$0xff] %vm570, %v568
      %572 = vst.msk [vmem:[%s280 + $0x8] sm:$0xff] %vm570, %v569
      %s573 = smul.u32 2, %s18
      %p574 = scmp.lt.s32.totalorder %s573, 7
      %s575 = scalar_select %p574, %s573, 7
      %s576 = smul.addr %s575, 8
      %s577 = scalar_lea.vmem %s7, %s576
      // Predicated region
      $region49: #{tpu_custom_call.1} parent=47 // pred_check
        %p578 = pneg %p188
      $region50: #{tpu_custom_call.1} parent=47 // pred_check_branch
        %580 = sbr.rel (%p578) target = $region52
      $region51: #{tpu_custom_call.1} parent=47 // pred_region
        %s581 = smul.u32 2, %s18
      $region52: #{tpu_custom_call.1} parent=47 // pred_fallthru
        _
    $region48: #{tpu_custom_call.1} parent=5 // pred_fallthru
      _
    %p582 = scmp.le.s32.totalorder 2, %s13
    // Predicated region
    $region53: #{tpu_custom_call.1} parent=5 // pred_check
      %p583 = pneg %p582
    $region54: #{tpu_custom_call.1} parent=5 // pred_check_branch
      %585 = sbr.rel (%p583) target = $region56
    $region55: #{tpu_custom_call.1} parent=5 // pred_region
      %s586 = ssub.s32 %s13, 2
      // Predicated region
      $region57: #{tpu_custom_call.1} parent=55 // pred_check
        %p587 = pneg %p194
      $region58: #{tpu_custom_call.1} parent=55 // pred_check_branch
        %589 = sbr.rel (%p587) target = $region60
      $region59: #{tpu_custom_call.1} parent=55 // pred_region
        %s590 = smul.u32 2, %s19
        %p591 = scmp.lt.s32.totalorder %s590, 7
        %s592 = scalar_select %p591, %s590, 7
        %s593 = smul.addr %s592, 8
        %s594 = scalar_lea.vmem %s7, %s593
      $region60: #{tpu_custom_call.1} parent=55 // pred_fallthru
        _
    $region56: #{tpu_custom_call.1} parent=5 // pred_fallthru
      _
  $region6: #{tpu_custom_call.1} parent=0 // loop_footer
    %s17 = sadd.s32 1, %s13
  $region7: #{tpu_custom_call.1} parent=0 // loop_footer_branch
    %12 = sbr.rel target = $region3
  $region8: #{tpu_custom_call.1} parent=0 // loop_exit
    _

</llo_original>
